<compile_context>
chip_gen: v7x
topology: tpu7x:2x2x1
jax: 0.10.0
libtpu: 0.0.40
codegen_flags: <defaults>
</compile_context>

<pallas_src>
import jax
import jax.numpy as jnp
from jax.experimental import pallas as pl
from jax.experimental.pallas import tpu as pltpu


def _cnf_fused_kernel(t_ref, x_ref, w1_ref, col_ref, w2t_ref, b2_ref, a_ref,
                      e_ref, f_ref, dx_ref, scal_ref):
    """One batch-chunk (n samples fused via block-diagonal weights).

    Shapes (nC = n*C, nHd = n*Hd, P = H*W, BP = sublane-padded sample rows):
      t_ref    (1,)         SMEM  scalar time
      x_ref    (1, nC, P)         fused input chunk (channel-major, pixels on lanes)
      w1_ref   (nHd, nC)          blockdiag_n(W1)
      col_ref  (nHd, 3)           columns [b1 | w1t | -d], tiled per sample
      w2t_ref  (nC, nHd)          blockdiag_n(W2^T)
      b2_ref   (nC, 1)
      a_ref    (nHd, nHd)         blockdiag_n(A),  A = (W2 W2^T) * (W1x^T W1x)
      e_ref    (BP, nHd)          per-sample row-sum selector over Hd-blocks
      f_ref    (BP, nC)           per-sample selector over C-blocks, * 0.5/(C*P)
      dx_ref   (1, nC, P)   out
      scal_ref (1, BP, 128) out   lanes [0,1,2] = [dlogp, kinetic, frobenius]
    """
    t = t_ref[0]
    x = x_ref[0]                                                   # (nC, P)

    # fold the scalar time into the first-layer bias (ConcatConv2d): b1 + t*w1t
    b1 = col_ref[:, 0:1] + t * col_ref[:, 1:2]                     # (nHd, 1)
    neg_d = col_ref[:, 2:3]                                        # (nHd, 1)

    # hot path: block-diagonal per-pixel MLP on the MXU, tanh on the EUP
    h = jnp.tanh(jnp.dot(w1_ref[...], x,
                         preferred_element_type=jnp.float32) + b1)           # (nHd, P)
    dx = jnp.dot(w2t_ref[...], h,
                 preferred_element_type=jnp.float32) + b2_ref[...]           # (nC, P)
    dx_ref[0] = dx.astype(dx_ref.dtype)

    s = 1.0 - h * h                                                # tanh'(pre)

    # per-row pixel reductions (cross-lane, XLU)
    r_div = jnp.sum(s, axis=1, keepdims=True) * neg_d              # (nHd, 1)
    m = jnp.dot(a_ref[...], s, preferred_element_type=jnp.float32)           # (nHd, P)
    r_fro = jnp.sum(m * s, axis=1, keepdims=True)                  # (nHd, 1)
    r_ke = jnp.sum(dx * dx, axis=1, keepdims=True)                 # (nC, 1)

    # per-sample block sums via tiny indicator matmuls (padded rows give 0)
    dlogp = jnp.dot(e_ref[...], r_div, preferred_element_type=jnp.float32)   # (BP, 1)
    fro = jnp.dot(e_ref[...], r_fro, preferred_element_type=jnp.float32)     # (BP, 1)
    ke = jnp.dot(f_ref[...], r_ke, preferred_element_type=jnp.float32)       # (BP, 1)

    # lane-dense scalar slab: lane 0 = dlogp, lane 1 = ke, lane 2 = fro
    lane = jax.lax.broadcasted_iota(jnp.int32, scal_ref.shape[1:], 1)        # (BP, 128)
    scal = (jnp.where(lane == 0, dlogp, 0.0)
            + jnp.where(lane == 1, ke, 0.0)
            + jnp.where(lane == 2, fro, 0.0))
    scal_ref[0] = scal.astype(scal_ref.dtype)


def pack_cnf_params(params, *, batch, channels, height, width, num_chunks=1):
    """One-time packing of all t/x-independent tables.

    Call ONCE per ODE integration (not per ODE step).  num_chunks=1 is optimal
    on single-TC v5e/v6e; set num_chunks=2 on dual-TC v7x so both TensorCores
    get a batch chunk.
    """
    w1x, w1t, b1, w2, b2 = params
    C, Hd = w1x.shape
    assert channels == C and w2.shape == (Hd, C)
    assert batch % num_chunks == 0
    n = batch // num_chunks
    P = height * width
    BP = max(8, ((n + 7) // 8) * 8)
    f32 = jnp.float32

    eye_n = jnp.eye(n, dtype=f32)
    w1_bd = jnp.kron(eye_n, w1x.T.astype(f32))                 # (n*Hd, n*C)
    w2t_bd = jnp.kron(eye_n, w2.T.astype(f32))                 # (n*C, n*Hd)
    A = ((w2 @ w2.T) * (w1x.T @ w1x)).astype(f32)              # (Hd, Hd)
    a_bd = jnp.kron(eye_n, A)                                  # (n*Hd, n*Hd)
    d = jnp.sum(w2 * w1x.T, axis=1).astype(f32)                # (Hd,)

    colpack = jnp.stack([jnp.tile(b1.astype(f32), n),
                         jnp.tile(w1t.astype(f32), n),
                         jnp.tile(-d, n)], axis=1)             # (n*Hd, 3)
    b2_col = jnp.tile(b2.astype(f32), n).reshape(n * C, 1)     # (n*C, 1)

    rows = jnp.arange(BP, dtype=jnp.int32)[:, None]
    e_sel = (rows == (jnp.arange(n * Hd, dtype=jnp.int32)[None, :] // Hd)).astype(f32)
    f_sel = (rows == (jnp.arange(n * C, dtype=jnp.int32)[None, :] // C)).astype(f32)
    f_sel = f_sel * (0.5 / (C * P))    # fold the kinetic-energy mean scale

    arrays = dict(w1_bd=w1_bd, colpack=colpack, w2t_bd=w2t_bd, b2_col=b2_col,
                  a_bd=a_bd, e_sel=e_sel, f_sel=f_sel)
    meta = dict(B=batch, C=C, H=height, W=width, Hd=Hd, P=P,
                n=n, num_chunks=num_chunks, BP=BP)
    return dict(arrays=arrays, meta=meta)


def regularized_cnf_odefunc(t, state, packed):
    """Mirrors RegularizedCNFODEfunc.forward for an augmented state.

    state = (x, logp[, reg1, reg2]) -> (dx, dlogp[, reg1_rate, reg2_rate]).
    Only the pallas_call plus free reshapes run here; all weight packing lives
    in pack_cnf_params.
    """
    a, mt = packed['arrays'], packed['meta']
    B, C, H, W = mt['B'], mt['C'], mt['H'], mt['W']
    P, n, nch, BP, Hd = mt['P'], mt['n'], mt['num_chunks'], mt['BP'], mt['Hd']
    nC, nHd = n * C, n * Hd

    x_nchw = state[0]
    x3 = x_nchw.reshape(nch, nC, P).astype(jnp.float32)   # free, channel-major
    t_arr = jnp.asarray(t, jnp.float32).reshape((1,))

    cmap = lambda i, t_s: (0, 0)
    flops = 2 * nch * P * (2 * nHd * nC + nHd * nHd) + 2 * nch * BP * (2 * nHd + nC)
    bytes_accessed = 4 * (2 * nch * nC * P + nch * BP * 128
                          + nHd * (nC + 3 + nHd) + nC * (nHd + 1)
                          + BP * (nHd + nC) + 1)

    dx3, scal = pl.pallas_call(
        _cnf_fused_kernel,
        out_shape=(jax.ShapeDtypeStruct((nch, nC, P), jnp.float32),
                   jax.ShapeDtypeStruct((nch, BP, 128), jnp.float32)),
        grid_spec=pltpu.PrefetchScalarGridSpec(
            num_scalar_prefetch=1,
            grid=(nch,),
            in_specs=[
                pl.BlockSpec((1, nC, P), lambda i, t_s: (i, 0, 0)),   # x chunk
                pl.BlockSpec((nHd, nC), cmap),                        # blockdiag W1
                pl.BlockSpec((nHd, 3), cmap),                         # [b1|w1t|-d]
                pl.BlockSpec((nC, nHd), cmap),                        # blockdiag W2^T
                pl.BlockSpec((nC, 1), cmap),                          # b2
                pl.BlockSpec((nHd, nHd), cmap),                       # blockdiag A
                pl.BlockSpec((BP, nHd), cmap),                        # E selector
                pl.BlockSpec((BP, nC), cmap),                         # F selector
            ],
            out_specs=[
                pl.BlockSpec((1, nC, P), lambda i, t_s: (i, 0, 0)),
                pl.BlockSpec((1, BP, 128), lambda i, t_s: (i, 0, 0)),
            ],
        ),
        compiler_params=pltpu.CompilerParams(
            dimension_semantics=("parallel",)),
        cost_estimate=pl.CostEstimate(flops=flops,
                                      transcendentals=nch * nHd * P,
                                      bytes_accessed=bytes_accessed),
    )(t_arr, x3, a['w1_bd'], a['colpack'], a['w2t_bd'], a['b2_col'],
      a['a_bd'], a['e_sel'], a['f_sel'])

    dx = dx3.reshape(B, C, H, W).astype(x_nchw.dtype)
    per = scal[:, :n, :3].reshape(B, 3)      # [dlogp, ke, fro] per sample
    dlogp = per[:, 0:1]
    if len(state) > 2:
        return (dx, dlogp, per[:, 1], per[:, 2])
    return (dx, dlogp)


def _reference(t, x_nchw, params):
    """Pure-JAX reference for dx / dlogp / regs (same analytic formulas)."""
    w1x, w1t, b1, w2, b2 = params
    B, C, H, W = x_nchw.shape
    x = jnp.transpose(x_nchw, (0, 2, 3, 1)).reshape(B, H * W, C)
    h = jnp.tanh(jnp.einsum('bpc,ch->bph', x, w1x) + b1 + t * w1t)
    dx = jnp.einsum('bph,hc->bpc', h, w2) + b2
    s = 1.0 - h * h
    d = jnp.sum(w2 * w1x.T, axis=1)
    A = (w2 @ w2.T) * (w1x.T @ w1x)
    dlogp = -jnp.sum(s * d, axis=(1, 2), keepdims=False).reshape(B, 1)
    ke = 0.5 * jnp.mean(dx ** 2, axis=(1, 2))
    fro = jnp.sum(jnp.einsum('bph,hk->bpk', s, A) * s, axis=(1, 2))
    dx_nchw = jnp.transpose(dx.reshape(B, H, W, C), (0, 3, 1, 2))
    return dx_nchw, dlogp, ke, fro


if __name__ == "__main__":
    B, C, H, W, Hd = 2, 4, 16, 16, 32
    key = jax.random.PRNGKey(0)
    k = jax.random.split(key, 6)
    x = jax.random.normal(k[0], (B, C, H, W), jnp.float32)
    logp = jnp.zeros((B, 1), jnp.float32)
    reg1 = jnp.zeros((B,), jnp.float32)
    reg2 = jnp.zeros((B,), jnp.float32)
    t = jnp.float32(0.5)

    params = (
        0.1 * jax.random.normal(k[1], (C, Hd), jnp.float32),   # W1 (x part)
        0.1 * jax.random.normal(k[2], (Hd,), jnp.float32),      # W1 (t part)
        0.1 * jax.random.normal(k[3], (Hd,), jnp.float32),      # b1
        0.1 * jax.random.normal(k[4], (Hd, C), jnp.float32),    # W2
        0.1 * jax.random.normal(k[5], (C,), jnp.float32),       # b2
    )

    # one-time packing: hoisted out of the per-ODE-step path
    # (set num_chunks=2 on dual-TensorCore v7x)
    packed = pack_cnf_params(params, batch=B, channels=C, height=H, width=W,
                             num_chunks=1)

    out = regularized_cnf_odefunc(t, (x, logp, reg1, reg2), packed)
    out = jax.block_until_ready(out)
    dx_k, dlogp_k, ke_k, fro_k = out

    dx_r, dlogp_r, ke_r, fro_r = _reference(t, x, params)
    assert jnp.allclose(dx_k, dx_r, atol=1e-5), "dx mismatch"
    assert jnp.allclose(dlogp_k, dlogp_r, atol=1e-4), "dlogp mismatch"
    assert jnp.allclose(ke_k, ke_r, atol=1e-5), "kinetic-energy reg mismatch"
    assert jnp.allclose(fro_k, fro_r, atol=1e-4), "frobenius reg mismatch"

    print("KERNEL_OK")
</pallas_src>

<mosaic_0001>
module attributes {stable_mosaic.version = 11 : i64} {
  func.func @_cnf_fused_kernel(%arg0: i32, %arg1: memref<1xf32, #tpu.memory_space<smem>>, %arg2: memref<1x8x256xf32, #tpu.memory_space<vmem>>, %arg3: memref<64x8xf32, #tpu.memory_space<vmem>>, %arg4: memref<64x3xf32, #tpu.memory_space<vmem>>, %arg5: memref<8x64xf32, #tpu.memory_space<vmem>>, %arg6: memref<8x1xf32, #tpu.memory_space<vmem>>, %arg7: memref<64x64xf32, #tpu.memory_space<vmem>>, %arg8: memref<8x64xf32, #tpu.memory_space<vmem>>, %arg9: memref<8x8xf32, #tpu.memory_space<vmem>>, %arg10: memref<1x8x256xf32, #tpu.memory_space<vmem>>, %arg11: memref<1x8x128xf32, #tpu.memory_space<vmem>>) attributes {dimension_semantics = [#tpu.dimension_semantics<parallel>], iteration_bounds = array<i64: 1>, scalar_prefetch = 1 : i64, scratch_operands = 0 : i64, tpu.core_type = #tpu.core_type<tc>, window_params = [{transform_indices = @transform_0, window_bounds = array<i64: 1, 8, 256>}, {pipeline_mode = #tpu.pipeline_mode<synchronous>, transform_indices = @transform_1, window_bounds = array<i64: 64, 8>}, {pipeline_mode = #tpu.pipeline_mode<synchronous>, transform_indices = @transform_2, window_bounds = array<i64: 64, 3>}, {pipeline_mode = #tpu.pipeline_mode<synchronous>, transform_indices = @transform_3, window_bounds = array<i64: 8, 64>}, {pipeline_mode = #tpu.pipeline_mode<synchronous>, transform_indices = @transform_4, window_bounds = array<i64: 8, 1>}, {pipeline_mode = #tpu.pipeline_mode<synchronous>, transform_indices = @transform_5, window_bounds = array<i64: 64, 64>}, {pipeline_mode = #tpu.pipeline_mode<synchronous>, transform_indices = @transform_6, window_bounds = array<i64: 8, 64>}, {pipeline_mode = #tpu.pipeline_mode<synchronous>, transform_indices = @transform_7, window_bounds = array<i64: 8, 8>}, {transform_indices = @transform_8, window_bounds = array<i64: 1, 8, 256>}, {transform_indices = @transform_9, window_bounds = array<i64: 1, 8, 128>}]} {
    %c0 = arith.constant 0 : index
    %0 = memref.load %arg1[%c0] : memref<1xf32, #tpu.memory_space<smem>>
    %c0_0 = arith.constant 0 : index
    %c0_1 = arith.constant 0 : index
    %c0_2 = arith.constant 0 : index
    %1 = vector.load %arg2[%c0_0, %c0_1, %c0_2] : memref<1x8x256xf32, #tpu.memory_space<vmem>>, vector<1x8x256xf32>
    %2 = vector.shape_cast %1 : vector<1x8x256xf32> to vector<8x256xf32>
    %c0_3 = arith.constant 0 : index
    %c0_4 = arith.constant 0 : index
    %3 = vector.load %arg4[%c0_3, %c0_4] : memref<64x3xf32, #tpu.memory_space<vmem>>, vector<64x1xf32>
    %c0_5 = arith.constant 0 : index
    %c1 = arith.constant 1 : index
    %4 = vector.load %arg4[%c0_5, %c1] : memref<64x3xf32, #tpu.memory_space<vmem>>, vector<64x1xf32>
    %5 = vector.broadcast %0 : f32 to vector<64x1xf32>
    %6 = arith.mulf %5, %4 : vector<64x1xf32>
    %7 = arith.addf %3, %6 : vector<64x1xf32>
    %c0_6 = arith.constant 0 : index
    %c2 = arith.constant 2 : index
    %8 = vector.load %arg4[%c0_6, %c2] : memref<64x3xf32, #tpu.memory_space<vmem>>, vector<64x1xf32>
    %c0_7 = arith.constant 0 : index
    %c0_8 = arith.constant 0 : index
    %9 = vector.load %arg3[%c0_7, %c0_8] : memref<64x8xf32, #tpu.memory_space<vmem>>, vector<64x8xf32>
    %cst = arith.constant dense<0.000000e+00> : vector<64x256xf32>
    %10 = tpu.matmul %9, %2, %cst {dimension_numbers = #tpu.dot_dimension_numbers<[1], [0], [0], [1], [0, 0, 1, 1], [], []>} : vector<64x8xf32>, vector<8x256xf32>, vector<64x256xf32> -> vector<64x256xf32>
    %11 = vector.broadcast %7 : vector<64x1xf32> to vector<64x256xf32>
    %12 = arith.addf %10, %11 : vector<64x256xf32>
    %13 = math.tanh %12 : vector<64x256xf32>
    %c0_9 = arith.constant 0 : index
    %c0_10 = arith.constant 0 : index
    %14 = vector.load %arg5[%c0_9, %c0_10] : memref<8x64xf32, #tpu.memory_space<vmem>>, vector<8x64xf32>
    %cst_11 = arith.constant dense<0.000000e+00> : vector<8x256xf32>
    %15 = tpu.matmul %14, %13, %cst_11 {dimension_numbers = #tpu.dot_dimension_numbers<[1], [0], [0], [1], [0, 0, 1, 1], [], []>} : vector<8x64xf32>, vector<64x256xf32>, vector<8x256xf32> -> vector<8x256xf32>
    %c0_12 = arith.constant 0 : index
    %c0_13 = arith.constant 0 : index
    %16 = vector.load %arg6[%c0_12, %c0_13] : memref<8x1xf32, #tpu.memory_space<vmem>>, vector<8x1xf32>
    %17 = vector.broadcast %16 : vector<8x1xf32> to vector<8x256xf32>
    %18 = arith.addf %15, %17 : vector<8x256xf32>
    %c0_14 = arith.constant 0 : index
    %c0_15 = arith.constant 0 : index
    %c0_16 = arith.constant 0 : index
    %19 = vector.load %arg10[%c0_14, %c0_15, %c0_16] : memref<1x8x256xf32, #tpu.memory_space<vmem>>, vector<1x8x256xf32>
    %20 = vector.shape_cast %19 : vector<1x8x256xf32> to vector<8x256xf32>
    %21 = vector.shape_cast %18 : vector<8x256xf32> to vector<1x8x256xf32>
    tpu.vector_store %arg10[%c0_14, %c0_15, %c0_16], %21 {strides = array<i32>} : memref<1x8x256xf32, #tpu.memory_space<vmem>>, vector<1x8x256xf32>,
    %22 = arith.mulf %13, %13 : vector<64x256xf32>
    %cst_17 = arith.constant 1.000000e+00 : f32
    %23 = vector.broadcast %cst_17 : f32 to vector<64x256xf32>
    %24 = arith.subf %23, %22 : vector<64x256xf32>
    %cst_18 = arith.constant dense<0.000000e+00> : vector<64xf32>
    %25 = vector.multi_reduction <add>, %24, %cst_18 [1] : vector<64x256xf32> to vector<64xf32>
    %26 = vector.shape_cast %25 : vector<64xf32> to vector<64x1xf32>
    %27 = arith.mulf %26, %8 : vector<64x1xf32>
    %c0_19 = arith.constant 0 : index
    %c0_20 = arith.constant 0 : index
    %28 = vector.load %arg7[%c0_19, %c0_20] : memref<64x64xf32, #tpu.memory_space<vmem>>, vector<64x64xf32>
    %cst_21 = arith.constant dense<0.000000e+00> : vector<64x256xf32>
    %29 = tpu.matmul %28, %24, %cst_21 {dimension_numbers = #tpu.dot_dimension_numbers<[1], [0], [0], [1], [0, 0, 1, 1], [], []>} : vector<64x64xf32>, vector<64x256xf32>, vector<64x256xf32> -> vector<64x256xf32>
    %30 = arith.mulf %29, %24 : vector<64x256xf32>
    %cst_22 = arith.constant dense<0.000000e+00> : vector<64xf32>
    %31 = vector.multi_reduction <add>, %30, %cst_22 [1] : vector<64x256xf32> to vector<64xf32>
    %32 = vector.shape_cast %31 : vector<64xf32> to vector<64x1xf32>
    %33 = arith.mulf %18, %18 : vector<8x256xf32>
    %cst_23 = arith.constant dense<0.000000e+00> : vector<8xf32>
    %34 = vector.multi_reduction <add>, %33, %cst_23 [1] : vector<8x256xf32> to vector<8xf32>
    %35 = vector.shape_cast %34 : vector<8xf32> to vector<8x1xf32>
    %c0_24 = arith.constant 0 : index
    %c0_25 = arith.constant 0 : index
    %36 = vector.load %arg8[%c0_24, %c0_25] : memref<8x64xf32, #tpu.memory_space<vmem>>, vector<8x64xf32>
    %cst_26 = arith.constant dense<0.000000e+00> : vector<8x1xf32>
    %37 = tpu.matmul %36, %27, %cst_26 {dimension_numbers = #tpu.dot_dimension_numbers<[1], [0], [0], [1], [0, 0, 1, 1], [], []>} : vector<8x64xf32>, vector<64x1xf32>, vector<8x1xf32> -> vector<8x1xf32>
    %c0_27 = arith.constant 0 : index
    %c0_28 = arith.constant 0 : index
    %38 = vector.load %arg8[%c0_27, %c0_28] : memref<8x64xf32, #tpu.memory_space<vmem>>, vector<8x64xf32>
    %cst_29 = arith.constant dense<0.000000e+00> : vector<8x1xf32>
    %39 = tpu.matmul %38, %32, %cst_29 {dimension_numbers = #tpu.dot_dimension_numbers<[1], [0], [0], [1], [0, 0, 1, 1], [], []>} : vector<8x64xf32>, vector<64x1xf32>, vector<8x1xf32> -> vector<8x1xf32>
    %c0_30 = arith.constant 0 : index
    %c0_31 = arith.constant 0 : index
    %40 = vector.load %arg9[%c0_30, %c0_31] : memref<8x8xf32, #tpu.memory_space<vmem>>, vector<8x8xf32>
    %cst_32 = arith.constant dense<0.000000e+00> : vector<8x1xf32>
    %41 = tpu.matmul %40, %35, %cst_32 {dimension_numbers = #tpu.dot_dimension_numbers<[1], [0], [0], [1], [0, 0, 1, 1], [], []>} : vector<8x8xf32>, vector<8x1xf32>, vector<8x1xf32> -> vector<8x1xf32>
    %42 = tpu.iota {dimensions = array<i32: 1>} : vector<8x128xi32>
    %c0_i32 = arith.constant 0 : i32
    %43 = vector.broadcast %c0_i32 : i32 to vector<8x128xi32>
    %44 = arith.cmpi eq, %42, %43 : vector<8x128xi32>
    %cst_33 = arith.constant 0.000000e+00 : f32
    %45 = vector.shape_cast %37 : vector<8x1xf32> to vector<8x1xf32>
    %46 = vector.broadcast %45 : vector<8x1xf32> to vector<8x128xf32>
    %47 = vector.broadcast %cst_33 : f32 to vector<8x128xf32>
    %48 = arith.select %44, %46, %47 : vector<8x128xi1>, vector<8x128xf32>
    %c1_i32 = arith.constant 1 : i32
    %49 = vector.broadcast %c1_i32 : i32 to vector<8x128xi32>
    %50 = arith.cmpi eq, %42, %49 : vector<8x128xi32>
    %cst_34 = arith.constant 0.000000e+00 : f32
    %51 = vector.shape_cast %41 : vector<8x1xf32> to vector<8x1xf32>
    %52 = vector.broadcast %51 : vector<8x1xf32> to vector<8x128xf32>
    %53 = vector.broadcast %cst_34 : f32 to vector<8x128xf32>
    %54 = arith.select %50, %52, %53 : vector<8x128xi1>, vector<8x128xf32>
    %55 = arith.addf %48, %54 : vector<8x128xf32>
    %c2_i32 = arith.constant 2 : i32
    %56 = vector.broadcast %c2_i32 : i32 to vector<8x128xi32>
    %57 = arith.cmpi eq, %42, %56 : vector<8x128xi32>
    %cst_35 = arith.constant 0.000000e+00 : f32
    %58 = vector.shape_cast %39 : vector<8x1xf32> to vector<8x1xf32>
    %59 = vector.broadcast %58 : vector<8x1xf32> to vector<8x128xf32>
    %60 = vector.broadcast %cst_35 : f32 to vector<8x128xf32>
    %61 = arith.select %57, %59, %60 : vector<8x128xi1>, vector<8x128xf32>
    %62 = arith.addf %55, %61 : vector<8x128xf32>
    %c0_36 = arith.constant 0 : index
    %c0_37 = arith.constant 0 : index
    %c0_38 = arith.constant 0 : index
    %63 = vector.load %arg11[%c0_36, %c0_37, %c0_38] : memref<1x8x128xf32, #tpu.memory_space<vmem>>, vector<1x8x128xf32>
    %64 = vector.shape_cast %63 : vector<1x8x128xf32> to vector<8x128xf32>
    %65 = vector.shape_cast %62 : vector<8x128xf32> to vector<1x8x128xf32>
    tpu.vector_store %arg11[%c0_36, %c0_37, %c0_38], %65 {strides = array<i32>} : memref<1x8x128xf32, #tpu.memory_space<vmem>>, vector<1x8x128xf32>,
    return
  }
  func.func @transform_0(%arg0: i32, %arg1: memref<1xf32, #tpu.memory_space<smem>>) -> (i32, i32, i32) {
    %c0_i32 = arith.constant 0 : i32
    %c0_i32_0 = arith.constant 0 : i32
    %c0_i32_1 = arith.constant 0 : i32
    return %arg0, %c0_i32, %c0_i32_0 : i32, i32, i32
  }
  func.func @transform_1(%arg0: i32, %arg1: memref<1xf32, #tpu.memory_space<smem>>) -> (i32, i32) {
    %c0_i32 = arith.constant 0 : i32
    %c0_i32_0 = arith.constant 0 : i32
    %c0_i32_1 = arith.constant 0 : i32
    return %c0_i32, %c0_i32_0 : i32, i32
  }
  func.func @transform_2(%arg0: i32, %arg1: memref<1xf32, #tpu.memory_space<smem>>) -> (i32, i32) {
    %c0_i32 = arith.constant 0 : i32
    %c0_i32_0 = arith.constant 0 : i32
    %c0_i32_1 = arith.constant 0 : i32
    return %c0_i32, %c0_i32_0 : i32, i32
  }
  func.func @transform_3(%arg0: i32, %arg1: memref<1xf32, #tpu.memory_space<smem>>) -> (i32, i32) {
    %c0_i32 = arith.constant 0 : i32
    %c0_i32_0 = arith.constant 0 : i32
    %c0_i32_1 = arith.constant 0 : i32
    return %c0_i32, %c0_i32_0 : i32, i32
  }
  func.func @transform_4(%arg0: i32, %arg1: memref<1xf32, #tpu.memory_space<smem>>) -> (i32, i32) {
    %c0_i32 = arith.constant 0 : i32
    %c0_i32_0 = arith.constant 0 : i32
    %c0_i32_1 = arith.constant 0 : i32
    return %c0_i32, %c0_i32_0 : i32, i32
  }
  func.func @transform_5(%arg0: i32, %arg1: memref<1xf32, #tpu.memory_space<smem>>) -> (i32, i32) {
    %c0_i32 = arith.constant 0 : i32
    %c0_i32_0 = arith.constant 0 : i32
    %c0_i32_1 = arith.constant 0 : i32
    return %c0_i32, %c0_i32_0 : i32, i32
  }
  func.func @transform_6(%arg0: i32, %arg1: memref<1xf32, #tpu.memory_space<smem>>) -> (i32, i32) {
    %c0_i32 = arith.constant 0 : i32
    %c0_i32_0 = arith.constant 0 : i32
    %c0_i32_1 = arith.constant 0 : i32
    return %c0_i32, %c0_i32_0 : i32, i32
  }
  func.func @transform_7(%arg0: i32, %arg1: memref<1xf32, #tpu.memory_space<smem>>) -> (i32, i32) {
    %c0_i32 = arith.constant 0 : i32
    %c0_i32_0 = arith.constant 0 : i32
    %c0_i32_1 = arith.constant 0 : i32
    return %c0_i32, %c0_i32_0 : i32, i32
  }
  func.func @transform_8(%arg0: i32, %arg1: memref<1xf32, #tpu.memory_space<smem>>) -> (i32, i32, i32) {
    %c0_i32 = arith.constant 0 : i32
    %c0_i32_0 = arith.constant 0 : i32
    %c0_i32_1 = arith.constant 0 : i32
    return %arg0, %c0_i32, %c0_i32_0 : i32, i32, i32
  }
  func.func @transform_9(%arg0: i32, %arg1: memref<1xf32, #tpu.memory_space<smem>>) -> (i32, i32, i32) {
    %c0_i32 = arith.constant 0 : i32
    %c0_i32_0 = arith.constant 0 : i32
    %c0_i32_1 = arith.constant 0 : i32
    return %arg0, %c0_i32, %c0_i32_0 : i32, i32, i32
  }
}

</mosaic_0001>

<llo_original>
// kernel: tpu_custom_call.1
$region0: #{tpu_custom_call.1}
  #allocation0 [shape = 'u32[]', space=smem, size = 0x4, offset = 0x4, fixed_abs, tag = 'smem constant byte address 0x4 - core index']
  #allocation1 [shape = 'u32[144,128]{1,0:T(1,128)}', space=vmem, size = 0x12000, scoped, tag = 'internal scratch']
  #allocation2 [shape = 's32[1]{0}', space=sflag, size = 0x4, scoped, tag = 'scoped memory for tpu_custom_call.1']
  #allocation3 [shape = 'f32[1]{0:T(128)S(6)}', space=smem, size = 0x200, scoped, tag = 'prefetched SMEM operand 0']
  %s0 = inlined_call_operand.<no memory space> [shape: f32[1], index: 0, kind: input, shape index: {}]
  %s1 = inlined_call_operand.vmem [shape: f32[1,8,256], index: 1, kind: input, shape index: {}]
  %s2 = inlined_call_operand.vmem [shape: f32[64,8], index: 2, kind: input, shape index: {}]
  %s3 = inlined_call_operand.vmem [shape: f32[64,3], index: 3, kind: input, shape index: {}]
  %s4 = inlined_call_operand.vmem [shape: f32[8,64], index: 4, kind: input, shape index: {}]
  %s5 = inlined_call_operand.vmem [shape: f32[8,1], index: 5, kind: input, shape index: {}]
  %s6 = inlined_call_operand.vmem [shape: f32[64,64], index: 6, kind: input, shape index: {}]
  %s7 = inlined_call_operand.vmem [shape: f32[8,64], index: 7, kind: input, shape index: {}]
  %s8 = inlined_call_operand.vmem [shape: f32[8,8], index: 8, kind: input, shape index: {}]
  %s9 = inlined_call_operand.hbm [shape: f32[1,8,256], index: 9, kind: output, shape index: {0}]
  %s10 = inlined_call_operand.hbm [shape: f32[1,8,128], index: 10, kind: output, shape index: {1}]
  %11 = xla_tuple %s9, %s10
  %s12 = sld [smem:[#allocation0]]
  $region50: #{tpu_custom_call.1} parent=0
    _
  %s14 = ssub.s32 1, %s12
  %s15 = scalar_select 0, %s14, %s12
  %16 = sst [smem:[#allocation3]] %s0
  $region1: #{tpu_custom_call.1} parent=0
    #allocation4 [shape = 'u8[8192]{0}', space=vmem, size = 0x2000, scoped, tag = 'output window, operand 0, single buffered']
    #allocation5 [shape = 's32[1]{0}', space=sflag, size = 0x4, scoped, tag = 'scoped memory for tpu_custom_call.1']
    #allocation6 [shape = 'u8[4096]{0}', space=vmem, size = 0x1000, scoped, tag = 'output window, operand 1, single buffered']
    #allocation7 [shape = 's32[1]{0}', space=sflag, size = 0x4, scoped, tag = 'scoped memory for tpu_custom_call.1']
    %17 = vsyncpa [#allocation5], 0
    %18 = vsyncpa [#allocation7], 0
    // Predicated region
    $region2: #{tpu_custom_call.1} parent=1 // pred_check
      _
    $region3: #{tpu_custom_call.1} parent=1 // pred_check_branch
      %20 = sbr.rel (0) target = $region5
    $region4: #{tpu_custom_call.1} parent=1 // pred_region
      _
    $region5: #{tpu_custom_call.1} parent=1 // pred_fallthru
      _
    // Predicated region
    $region6: #{tpu_custom_call.1} parent=1 // pred_check
      _
    $region7: #{tpu_custom_call.1} parent=1 // pred_check_branch
      %22 = sbr.rel (0) target = $region9
    $region8: #{tpu_custom_call.1} parent=1 // pred_region
      _
    $region9: #{tpu_custom_call.1} parent=1 // pred_fallthru
      _
    // Predicated region
    $region10: #{tpu_custom_call.1} parent=1 // pred_check
      _
    $region11: #{tpu_custom_call.1} parent=1 // pred_check_branch
      %24 = sbr.rel (0) target = $region13
    $region12: #{tpu_custom_call.1} parent=1 // pred_region
      _
    $region13: #{tpu_custom_call.1} parent=1 // pred_fallthru
      _
    // Predicated region
    $region14: #{tpu_custom_call.1} parent=1 // pred_check
      _
    $region15: #{tpu_custom_call.1} parent=1 // pred_check_branch
      %26 = sbr.rel (0) target = $region17
    $region16: #{tpu_custom_call.1} parent=1 // pred_region
      _
    $region17: #{tpu_custom_call.1} parent=1 // pred_fallthru
      _
    // Predicated region
    $region18: #{tpu_custom_call.1} parent=1 // pred_check
      _
    $region19: #{tpu_custom_call.1} parent=1 // pred_check_branch
      %28 = sbr.rel (0) target = $region21
    $region20: #{tpu_custom_call.1} parent=1 // pred_region
      _
    $region21: #{tpu_custom_call.1} parent=1 // pred_fallthru
      _
    // Predicated region
    $region22: #{tpu_custom_call.1} parent=1 // pred_check
      _
    $region23: #{tpu_custom_call.1} parent=1 // pred_check_branch
      %30 = sbr.rel (0) target = $region25
    $region24: #{tpu_custom_call.1} parent=1 // pred_region
      _
    $region25: #{tpu_custom_call.1} parent=1 // pred_fallthru
      _
    // Predicated region
    $region26: #{tpu_custom_call.1} parent=1 // pred_check
      _
    $region27: #{tpu_custom_call.1} parent=1 // pred_check_branch
      %32 = sbr.rel (0) target = $region29
    $region28: #{tpu_custom_call.1} parent=1 // pred_region
      _
    $region29: #{tpu_custom_call.1} parent=1 // pred_fallthru
      _
    // Predicated region
    $region30: #{tpu_custom_call.1} parent=1 // pred_check
      _
    $region31: #{tpu_custom_call.1} parent=1 // pred_check_branch
      %34 = sbr.rel (0) target = $region33
    $region32: #{tpu_custom_call.1} parent=1 // pred_region
      _
    $region33: #{tpu_custom_call.1} parent=1 // pred_fallthru
      _
    %s35 = sld [smem:[#allocation3]]
    %v36 = vld [vmem:[%s1] sm:$0xff]
    %v37 = vld [vmem:[%s1 + $0x8] sm:$0xff]
    %v38 = vld [vmem:[%s3] sm:$0xff]
    %v39 = vld [vmem:[%s3 + $0x8] sm:$0xff]
    %v40 = vld [vmem:[%s3 + $0x10] sm:$0xff]
    %v41 = vld [vmem:[%s3 + $0x18] sm:$0xff]
    %v42 = vld [vmem:[%s3 + $0x20] sm:$0xff]
    %v43 = vld [vmem:[%s3 + $0x28] sm:$0xff]
    %v44 = vld [vmem:[%s3 + $0x30] sm:$0xff]
    %v45 = vld [vmem:[%s3 + $0x38] sm:$0xff]
    %v46 = vstv %s35
    %v47 = vmul.f32 %v46, %v38
    %v48 = vmul.f32 %v46, %v39
    %v49 = vmul.f32 %v46, %v40
    %v50 = vmul.f32 %v46, %v41
    %v51 = vmul.f32 %v46, %v42
    %v52 = vmul.f32 %v46, %v43
    %v53 = vmul.f32 %v46, %v44
    %v54 = vmul.f32 %v46, %v45
    %63 = vrot.lane.b32.xlu0 %v47, 127
    %v64 = vpop.permute.xlu0 %63
    %65 = vrot.lane.b32.xlu0 %v48, 127
    %v66 = vpop.permute.xlu0 %65
    %67 = vrot.lane.b32.xlu0 %v49, 127
    %v68 = vpop.permute.xlu0 %67
    %69 = vrot.lane.b32.xlu0 %v50, 127
    %v70 = vpop.permute.xlu0 %69
    %71 = vrot.lane.b32.xlu0 %v51, 127
    %v72 = vpop.permute.xlu0 %71
    %73 = vrot.lane.b32.xlu0 %v52, 127
    %v74 = vpop.permute.xlu0 %73
    %75 = vrot.lane.b32.xlu0 %v53, 127
    %v76 = vpop.permute.xlu0 %75
    %77 = vrot.lane.b32.xlu0 %v54, 127
    %v78 = vpop.permute.xlu0 %77
    %v87 = vadd.f32 %v38, %v64
    %v88 = vadd.f32 %v39, %v66
    %v89 = vadd.f32 %v40, %v68
    %v90 = vadd.f32 %v41, %v70
    %v91 = vadd.f32 %v42, %v72
    %v92 = vadd.f32 %v43, %v74
    %v93 = vadd.f32 %v44, %v76
    %v94 = vadd.f32 %v45, %v78
    %v95 = vld [vmem:[%s2] sm:$0xff]
    %v96 = vld [vmem:[%s2 + $0x8] sm:$0xff]
    %v97 = vld [vmem:[%s2 + $0x10] sm:$0xff]
    %v98 = vld [vmem:[%s2 + $0x18] sm:$0xff]
    %v99 = vld [vmem:[%s2 + $0x20] sm:$0xff]
    %v100 = vld [vmem:[%s2 + $0x28] sm:$0xff]
    %v101 = vld [vmem:[%s2 + $0x30] sm:$0xff]
    %v102 = vld [vmem:[%s2 + $0x38] sm:$0xff]
    %104 = vset.pattern.permute.xlu0 0
    %105 = vperm.xlu0 %104, %v87
    %v106 = vpop.permute.xlu0 %105
    %109 = vset.pattern.permute.xlu0 0
    %110 = vperm.xlu0 %109, %v88
    %v111 = vpop.permute.xlu0 %110
    %114 = vset.pattern.permute.xlu0 0
    %115 = vperm.xlu0 %114, %v89
    %v116 = vpop.permute.xlu0 %115
    %119 = vset.pattern.permute.xlu0 0
    %120 = vperm.xlu0 %119, %v90
    %v121 = vpop.permute.xlu0 %120
    %124 = vset.pattern.permute.xlu0 0
    %125 = vperm.xlu0 %124, %v91
    %v126 = vpop.permute.xlu0 %125
    %129 = vset.pattern.permute.xlu0 0
    %130 = vperm.xlu0 %129, %v92
    %v131 = vpop.permute.xlu0 %130
    %134 = vset.pattern.permute.xlu0 0
    %135 = vperm.xlu0 %134, %v93
    %v136 = vpop.permute.xlu0 %135
    %139 = vset.pattern.permute.xlu0 0
    %140 = vperm.xlu0 %139, %v94
    %v141 = vpop.permute.xlu0 %140
    %vm143 = vcmask 64512
    %v145 = vsel %vm143, %v95, 0
    %v148 = vsel %vm143, %v96, 0
    %v151 = vsel %vm143, %v97, 0
    %v154 = vsel %vm143, %v98, 0
    %v157 = vsel %vm143, %v99, 0
    %v160 = vsel %vm143, %v100, 0
    %v163 = vsel %vm143, %v101, 0
    %v166 = vsel %vm143, %v102, 0
    %168 = vmatprep.subr.mxu0 %v37
    %169 = vmatpush1.msra.mxu0 %v36
    %170 = vmatprep.subr.mxu0 0.0
    %171 = vmatpush1.msra.mxu0 0.0
    %172 = vmatprep.subr.mxu0 0.0
    %173 = vmatpush1.msra.mxu0 0.0
    %174 = vmatprep.subr.mxu0 0.0
    %175 = vmatpush1.msra.mxu0 0.0
    %176 = vmatprep.subr.mxu0 0.0
    %177 = vmatpush1.msra.mxu0 0.0
    %178 = vmatprep.subr.mxu0 0.0
    %179 = vmatpush1.msra.mxu0 0.0
    %180 = vmatprep.subr.mxu0 0.0
    %181 = vmatpush1.msra.mxu0 0.0
    %182 = vmatprep.subr.mxu0 0.0
    %183 = vmatpush1.msra.mxu0 0.0
    %184 = vmatprep.subr.mxu0 0.0
    %185 = vmatpush1.msra.mxu0 0.0
    %186 = vmatprep.subr.mxu0 0.0
    %187 = vmatpush1.msra.mxu0 0.0
    %188 = vmatprep.subr.mxu0 0.0
    %189 = vmatpush1.msra.mxu0 0.0
    %190 = vmatprep.subr.mxu0 0.0
    %191 = vmatpush1.msra.mxu0 0.0
    %192 = vmatprep.subr.mxu0 0.0
    %193 = vmatpush1.msra.mxu0 0.0
    %194 = vmatprep.subr.mxu0 0.0
    %195 = vmatpush1.msra.mxu0 0.0
    %196 = vmatprep.subr.mxu0 0.0
    %197 = vmatpush1.msra.mxu0 0.0
    %198 = vmatprep.subr.mxu0 0.0
    %199 = vmatpush1.msra.mxu0 0.0
    %200 = vmatprep.subr.mxu0 0.0
    %201 = vmatpush1.msra.mxu0 0.0
    %202 = vmatprep.subr.mxu0 0.0
    %203 = vmatpush1.msra.mxu0 0.0
    %204 = vmatprep.subr.mxu0 0.0
    %205 = vmatpush1.msra.mxu0 0.0
    %206 = vmatprep.subr.mxu0 0.0
    %207 = vmatpush1.msra.mxu0 0.0
    %208 = vmatprep.subr.mxu0 0.0
    %209 = vmatpush1.msra.mxu0 0.0
    %210 = vmatprep.subr.mxu0 0.0
    %211 = vmatpush1.msra.mxu0 0.0
    %212 = vmatprep.subr.mxu0 0.0
    %213 = vmatpush1.msra.mxu0 0.0
    %214 = vmatprep.subr.mxu0 0.0
    %215 = vmatpush1.msra.mxu0 0.0
    %216 = vmatprep.subr.mxu0 0.0
    %217 = vmatpush1.msra.mxu0 0.0
    %218 = vmatprep.subr.mxu0 0.0
    %219 = vmatpush1.msra.mxu0 0.0
    %220 = vmatprep.subr.mxu0 0.0
    %221 = vmatpush1.msra.mxu0 0.0
    %222 = vmatprep.subr.mxu0 0.0
    %223 = vmatpush1.msra.mxu0 0.0
    %224 = vmatprep.subr.mxu0 0.0
    %225 = vmatpush1.msra.mxu0 0.0
    %226 = vmatprep.subr.mxu0 0.0
    %227 = vmatpush1.msra.mxu0 0.0
    %228 = vmatprep.subr.mxu0 0.0
    %229 = vmatpush1.msra.mxu0 0.0
    %230 = vmatprep.subr.mxu0 0.0
    %231 = vmatpush1.msra.mxu0 0.0
    %232 = vmatprep.mubr.f32.mxu0 0.0
    %233 = vmatmul.mubr.f32.gmra.mrb[0].mxu0 %v145
    %v234 = vpop.f32.mrb[0].mxu0
    %v235 = vadd.f32 %v106, %v234
    %v236 = vpop.f32.mrb[0].mxu0
    %v237 = vadd.f32 %v106, %v236
    %238 = vmatprep.mubr.f32.mxu0 0.0
    %239 = vmatmul.mubr.f32.gmra.mrb[0].mxu0 %v148
    %v240 = vpop.f32.mrb[0].mxu0
    %v241 = vadd.f32 %v111, %v240
    %v242 = vpop.f32.mrb[0].mxu0
    %v243 = vadd.f32 %v111, %v242
    %244 = vmatprep.mubr.f32.mxu0 0.0
    %245 = vmatmul.mubr.f32.gmra.mrb[0].mxu0 %v151
    %v246 = vpop.f32.mrb[0].mxu0
    %v247 = vadd.f32 %v116, %v246
    %v248 = vpop.f32.mrb[0].mxu0
    %v249 = vadd.f32 %v116, %v248
    %250 = vmatprep.mubr.f32.mxu0 0.0
    %251 = vmatmul.mubr.f32.gmra.mrb[0].mxu0 %v154
    %v252 = vpop.f32.mrb[0].mxu0
    %v253 = vadd.f32 %v121, %v252
    %v254 = vpop.f32.mrb[0].mxu0
    %v255 = vadd.f32 %v121, %v254
    %256 = vmatprep.mubr.f32.mxu0 0.0
    %257 = vmatmul.mubr.f32.gmra.mrb[0].mxu0 %v157
    %v258 = vpop.f32.mrb[0].mxu0
    %v259 = vadd.f32 %v126, %v258
    %v260 = vpop.f32.mrb[0].mxu0
    %v261 = vadd.f32 %v126, %v260
    %262 = vmatprep.mubr.f32.mxu0 0.0
    %263 = vmatmul.mubr.f32.gmra.mrb[0].mxu0 %v160
    %v264 = vpop.f32.mrb[0].mxu0
    %v265 = vadd.f32 %v131, %v264
    %v266 = vpop.f32.mrb[0].mxu0
    %v267 = vadd.f32 %v131, %v266
    %268 = vmatprep.mubr.f32.mxu0 0.0
    %269 = vmatmul.mubr.f32.gmra.mrb[0].mxu0 %v163
    %v270 = vpop.f32.mrb[0].mxu0
    %v271 = vadd.f32 %v136, %v270
    %v272 = vpop.f32.mrb[0].mxu0
    %v273 = vadd.f32 %v136, %v272
    %274 = vmatprep.mubr.f32.mxu0 0.0
    %275 = vmatmul.mubr.f32.gmra.mrb[0].mxu0 %v166
    %v276 = vpop.f32.mrb[0].mxu0
    %v277 = vadd.f32 %v141, %v276
    %v278 = vpop.f32.mrb[0].mxu0
    %v279 = vadd.f32 %v141, %v278
    %280 = vdwg.mxu0
    %v281 = vtanh.pop %v235
    %v282 = vtanh.pop %v237
    %v283 = vtanh.pop %v241
    %v284 = vtanh.pop %v243
    %v285 = vtanh.pop %v247
    %v286 = vtanh.pop %v249
    %v287 = vtanh.pop %v253
    %v288 = vtanh.pop %v255
    %v289 = vtanh.pop %v259
    %v290 = vtanh.pop %v261
    %v291 = vtanh.pop %v265
    %v292 = vtanh.pop %v267
    %v293 = vtanh.pop %v271
    %v294 = vtanh.pop %v273
    %v295 = vtanh.pop %v277
    %v296 = vtanh.pop %v279
    %v297 = vld [vmem:[%s4] sm:$0xff]
    %v298 = vld [vmem:[%s5] sm:$0xff]
    %300 = vset.pattern.permute.xlu0 0
    %301 = vperm.xlu0 %300, %v298
    %v302 = vpop.permute.xlu0 %301
    %vm304 = vcmask 523264
    %v306 = vsel %vm304, %v297, 0
    %308 = vmatprep.subr.mxu0 %v282
    %309 = vmatpush1.msra.mxu0 %v281
    %310 = vmatprep.subr.mxu0 %v284
    %311 = vmatpush1.msra.mxu0 %v283
    %312 = vmatprep.subr.mxu0 %v286
    %313 = vmatpush1.msra.mxu0 %v285
    %314 = vmatprep.subr.mxu0 %v288
    %315 = vmatpush1.msra.mxu0 %v287
    %316 = vmatprep.subr.mxu0 %v290
    %317 = vmatpush1.msra.mxu0 %v289
    %318 = vmatprep.subr.mxu0 %v292
    %319 = vmatpush1.msra.mxu0 %v291
    %320 = vmatprep.subr.mxu0 %v294
    %321 = vmatpush1.msra.mxu0 %v293
    %322 = vmatprep.subr.mxu0 %v296
    %323 = vmatpush1.msra.mxu0 %v295
    %324 = vmatprep.subr.mxu0 0.0
    %325 = vmatpush1.msra.mxu0 0.0
    %326 = vmatprep.subr.mxu0 0.0
    %327 = vmatpush1.msra.mxu0 0.0
    %328 = vmatprep.subr.mxu0 0.0
    %329 = vmatpush1.msra.mxu0 0.0
    %330 = vmatprep.subr.mxu0 0.0
    %331 = vmatpush1.msra.mxu0 0.0
    %332 = vmatprep.subr.mxu0 0.0
    %333 = vmatpush1.msra.mxu0 0.0
    %334 = vmatprep.subr.mxu0 0.0
    %335 = vmatpush1.msra.mxu0 0.0
    %336 = vmatprep.subr.mxu0 0.0
    %337 = vmatpush1.msra.mxu0 0.0
    %338 = vmatprep.subr.mxu0 0.0
    %339 = vmatpush1.msra.mxu0 0.0
    %340 = vmatprep.subr.mxu0 0.0
    %341 = vmatpush1.msra.mxu0 0.0
    %342 = vmatprep.subr.mxu0 0.0
    %343 = vmatpush1.msra.mxu0 0.0
    %344 = vmatprep.subr.mxu0 0.0
    %345 = vmatpush1.msra.mxu0 0.0
    %346 = vmatprep.subr.mxu0 0.0
    %347 = vmatpush1.msra.mxu0 0.0
    %348 = vmatprep.subr.mxu0 0.0
    %349 = vmatpush1.msra.mxu0 0.0
    %350 = vmatprep.subr.mxu0 0.0
    %351 = vmatpush1.msra.mxu0 0.0
    %352 = vmatprep.subr.mxu0 0.0
    %353 = vmatpush1.msra.mxu0 0.0
    %354 = vmatprep.subr.mxu0 0.0
    %355 = vmatpush1.msra.mxu0 0.0
    %356 = vmatprep.subr.mxu0 0.0
    %357 = vmatpush1.msra.mxu0 0.0
    %358 = vmatprep.subr.mxu0 0.0
    %359 = vmatpush1.msra.mxu0 0.0
    %360 = vmatprep.subr.mxu0 0.0
    %361 = vmatpush1.msra.mxu0 0.0
    %362 = vmatprep.subr.mxu0 0.0
    %363 = vmatpush1.msra.mxu0 0.0
    %364 = vmatprep.subr.mxu0 0.0
    %365 = vmatpush1.msra.mxu0 0.0
    %366 = vmatprep.subr.mxu0 0.0
    %367 = vmatpush1.msra.mxu0 0.0
    %368 = vmatprep.subr.mxu0 0.0
    %369 = vmatpush1.msra.mxu0 0.0
    %370 = vmatprep.subr.mxu0 0.0
    %371 = vmatpush1.msra.mxu0 0.0
    %372 = vmatprep.mubr.f32.mxu0 0.0
    %373 = vmatmul.mubr.f32.gmra.mrb[0].mxu0 %v306
    %v374 = vpop.f32.mrb[0].mxu0
    %v375 = vadd.f32 %v302, %v374
    %v376 = vpop.f32.mrb[0].mxu0
    %v377 = vadd.f32 %v302, %v376
    %378 = vdwg.mxu0
    %379 = vst [vmem:[#allocation4] sm:$0xff] %v375
    %380 = vst [vmem:[#allocation4 + $0x8] sm:$0xff] %v377
    %v381 = vmul.f32 %v281, %v281
    %v382 = vmul.f32 %v282, %v282
    %v383 = vmul.f32 %v283, %v283
    %v384 = vmul.f32 %v284, %v284
    %v385 = vmul.f32 %v285, %v285
    %v386 = vmul.f32 %v286, %v286
    %v387 = vmul.f32 %v287, %v287
    %v388 = vmul.f32 %v288, %v288
    %v389 = vmul.f32 %v289, %v289
    %v390 = vmul.f32 %v290, %v290
    %v391 = vmul.f32 %v291, %v291
    %v392 = vmul.f32 %v292, %v292
    %v393 = vmul.f32 %v293, %v293
    %v394 = vmul.f32 %v294, %v294
    %v395 = vmul.f32 %v295, %v295
    %v396 = vmul.f32 %v296, %v296
    %v397 = vsub.f32 1.0, %v381
    %v398 = vsub.f32 1.0, %v382
    %v399 = vsub.f32 1.0, %v383
    %v400 = vsub.f32 1.0, %v384
    %v401 = vsub.f32 1.0, %v385
    %v402 = vsub.f32 1.0, %v386
    %v403 = vsub.f32 1.0, %v387
    %v404 = vsub.f32 1.0, %v388
    %v405 = vsub.f32 1.0, %v389
    %v406 = vsub.f32 1.0, %v390
    %v407 = vsub.f32 1.0, %v391
    %v408 = vsub.f32 1.0, %v392
    %v409 = vsub.f32 1.0, %v393
    %v410 = vsub.f32 1.0, %v394
    %v411 = vsub.f32 1.0, %v395
    %v412 = vsub.f32 1.0, %v396
    %v413 = vadd.f32 %v397, %v398
    %414 = vadd.xlane.f32.xlu0 %v413
    %v415 = vpop.xlane.xlu0 %414
    %v416 = vadd.f32 %v399, %v400
    %417 = vadd.xlane.f32.xlu0 %v416
    %v418 = vpop.xlane.xlu0 %417
    %v419 = vadd.f32 %v401, %v402
    %420 = vadd.xlane.f32.xlu0 %v419
    %v421 = vpop.xlane.xlu0 %420
    %v422 = vadd.f32 %v403, %v404
    %423 = vadd.xlane.f32.xlu0 %v422
    %v424 = vpop.xlane.xlu0 %423
    %v425 = vadd.f32 %v405, %v406
    %426 = vadd.xlane.f32.xlu0 %v425
    %v427 = vpop.xlane.xlu0 %426
    %v428 = vadd.f32 %v407, %v408
    %429 = vadd.xlane.f32.xlu0 %v428
    %v430 = vpop.xlane.xlu0 %429
    %v431 = vadd.f32 %v409, %v410
    %432 = vadd.xlane.f32.xlu0 %v431
    %v433 = vpop.xlane.xlu0 %432
    %v434 = vadd.f32 %v411, %v412
    %435 = vadd.xlane.f32.xlu0 %v434
    %v436 = vpop.xlane.xlu0 %435
    %v437 = vmul.f32 %v415, %v38
    %v438 = vmul.f32 %v418, %v39
    %v439 = vmul.f32 %v421, %v40
    %v440 = vmul.f32 %v424, %v41
    %v441 = vmul.f32 %v427, %v42
    %v442 = vmul.f32 %v430, %v43
    %v443 = vmul.f32 %v433, %v44
    %v444 = vmul.f32 %v436, %v45
    %v445 = vld [vmem:[%s6] sm:$0xff]
    %v446 = vld [vmem:[%s6 + $0x8] sm:$0xff]
    %v447 = vld [vmem:[%s6 + $0x10] sm:$0xff]
    %v448 = vld [vmem:[%s6 + $0x18] sm:$0xff]
    %v449 = vld [vmem:[%s6 + $0x20] sm:$0xff]
    %v450 = vld [vmem:[%s6 + $0x28] sm:$0xff]
    %v451 = vld [vmem:[%s6 + $0x30] sm:$0xff]
    %v452 = vld [vmem:[%s6 + $0x38] sm:$0xff]
    %v454 = vsel %vm304, %v445, 0
    %v457 = vsel %vm304, %v446, 0
    %v460 = vsel %vm304, %v447, 0
    %v463 = vsel %vm304, %v448, 0
    %v466 = vsel %vm304, %v449, 0
    %v469 = vsel %vm304, %v450, 0
    %v472 = vsel %vm304, %v451, 0
    %v475 = vsel %vm304, %v452, 0
    %477 = vmatprep.subr.mxu0 %v398
    %478 = vmatpush1.msra.mxu0 %v397
    %479 = vmatprep.subr.mxu0 %v400
    %480 = vmatpush1.msra.mxu0 %v399
    %481 = vmatprep.subr.mxu0 %v402
    %482 = vmatpush1.msra.mxu0 %v401
    %483 = vmatprep.subr.mxu0 %v404
    %484 = vmatpush1.msra.mxu0 %v403
    %485 = vmatprep.subr.mxu0 %v406
    %486 = vmatpush1.msra.mxu0 %v405
    %487 = vmatprep.subr.mxu0 %v408
    %488 = vmatpush1.msra.mxu0 %v407
    %489 = vmatprep.subr.mxu0 %v410
    %490 = vmatpush1.msra.mxu0 %v409
    %491 = vmatprep.subr.mxu0 %v412
    %492 = vmatpush1.msra.mxu0 %v411
    %493 = vmatprep.subr.mxu0 0.0
    %494 = vmatpush1.msra.mxu0 0.0
    %495 = vmatprep.subr.mxu0 0.0
    %496 = vmatpush1.msra.mxu0 0.0
    %497 = vmatprep.subr.mxu0 0.0
    %498 = vmatpush1.msra.mxu0 0.0
    %499 = vmatprep.subr.mxu0 0.0
    %500 = vmatpush1.msra.mxu0 0.0
    %501 = vmatprep.subr.mxu0 0.0
    %502 = vmatpush1.msra.mxu0 0.0
    %503 = vmatprep.subr.mxu0 0.0
    %504 = vmatpush1.msra.mxu0 0.0
    %505 = vmatprep.subr.mxu0 0.0
    %506 = vmatpush1.msra.mxu0 0.0
    %507 = vmatprep.subr.mxu0 0.0
    %508 = vmatpush1.msra.mxu0 0.0
    %509 = vmatprep.subr.mxu0 0.0
    %510 = vmatpush1.msra.mxu0 0.0
    %511 = vmatprep.subr.mxu0 0.0
    %512 = vmatpush1.msra.mxu0 0.0
    %513 = vmatprep.subr.mxu0 0.0
    %514 = vmatpush1.msra.mxu0 0.0
    %515 = vmatprep.subr.mxu0 0.0
    %516 = vmatpush1.msra.mxu0 0.0
    %517 = vmatprep.subr.mxu0 0.0
    %518 = vmatpush1.msra.mxu0 0.0
    %519 = vmatprep.subr.mxu0 0.0
    %520 = vmatpush1.msra.mxu0 0.0
    %521 = vmatprep.subr.mxu0 0.0
    %522 = vmatpush1.msra.mxu0 0.0
    %523 = vmatprep.subr.mxu0 0.0
    %524 = vmatpush1.msra.mxu0 0.0
    %525 = vmatprep.subr.mxu0 0.0
    %526 = vmatpush1.msra.mxu0 0.0
    %527 = vmatprep.subr.mxu0 0.0
    %528 = vmatpush1.msra.mxu0 0.0
    %529 = vmatprep.subr.mxu0 0.0
    %530 = vmatpush1.msra.mxu0 0.0
    %531 = vmatprep.subr.mxu0 0.0
    %532 = vmatpush1.msra.mxu0 0.0
    %533 = vmatprep.subr.mxu0 0.0
    %534 = vmatpush1.msra.mxu0 0.0
    %535 = vmatprep.subr.mxu0 0.0
    %536 = vmatpush1.msra.mxu0 0.0
    %537 = vmatprep.subr.mxu0 0.0
    %538 = vmatpush1.msra.mxu0 0.0
    %539 = vmatprep.subr.mxu0 0.0
    %540 = vmatpush1.msra.mxu0 0.0
    %541 = vmatprep.mubr.f32.mxu0 0.0
    %542 = vmatmul.mubr.f32.gmra.mrb[0].mxu0 %v454
    %v543 = vpop.f32.mrb[0].mxu0
    %v544 = vadd.f32 0.0, %v543
    %v545 = vpop.f32.mrb[0].mxu0
    %v546 = vadd.f32 0.0, %v545
    %547 = vmatprep.mubr.f32.mxu0 0.0
    %548 = vmatmul.mubr.f32.gmra.mrb[0].mxu0 %v457
    %v549 = vpop.f32.mrb[0].mxu0
    %v550 = vadd.f32 0.0, %v549
    %v551 = vpop.f32.mrb[0].mxu0
    %v552 = vadd.f32 0.0, %v551
    %553 = vmatprep.mubr.f32.mxu0 0.0
    %554 = vmatmul.mubr.f32.gmra.mrb[0].mxu0 %v460
    %v555 = vpop.f32.mrb[0].mxu0
    %v556 = vadd.f32 0.0, %v555
    %v557 = vpop.f32.mrb[0].mxu0
    %v558 = vadd.f32 0.0, %v557
    %559 = vmatprep.mubr.f32.mxu0 0.0
    %560 = vmatmul.mubr.f32.gmra.mrb[0].mxu0 %v463
    %v561 = vpop.f32.mrb[0].mxu0
    %v562 = vadd.f32 0.0, %v561
    %v563 = vpop.f32.mrb[0].mxu0
    %v564 = vadd.f32 0.0, %v563
    %565 = vmatprep.mubr.f32.mxu0 0.0
    %566 = vmatmul.mubr.f32.gmra.mrb[0].mxu0 %v466
    %v567 = vpop.f32.mrb[0].mxu0
    %v568 = vadd.f32 0.0, %v567
    %v569 = vpop.f32.mrb[0].mxu0
    %v570 = vadd.f32 0.0, %v569
    %571 = vmatprep.mubr.f32.mxu0 0.0
    %572 = vmatmul.mubr.f32.gmra.mrb[0].mxu0 %v469
    %v573 = vpop.f32.mrb[0].mxu0
    %v574 = vadd.f32 0.0, %v573
    %v575 = vpop.f32.mrb[0].mxu0
    %v576 = vadd.f32 0.0, %v575
    %577 = vmatprep.mubr.f32.mxu0 0.0
    %578 = vmatmul.mubr.f32.gmra.mrb[0].mxu0 %v472
    %v579 = vpop.f32.mrb[0].mxu0
    %v580 = vadd.f32 0.0, %v579
    %v581 = vpop.f32.mrb[0].mxu0
    %v582 = vadd.f32 0.0, %v581
    %583 = vmatprep.mubr.f32.mxu0 0.0
    %584 = vmatmul.mubr.f32.gmra.mrb[0].mxu0 %v475
    %v585 = vpop.f32.mrb[0].mxu0
    %v586 = vadd.f32 0.0, %v585
    %v587 = vpop.f32.mrb[0].mxu0
    %v588 = vadd.f32 0.0, %v587
    %589 = vdwg.mxu0
    %v590 = vmul.f32 %v544, %v397
    %v591 = vmul.f32 %v546, %v398
    %v592 = vmul.f32 %v550, %v399
    %v593 = vmul.f32 %v552, %v400
    %v594 = vmul.f32 %v556, %v401
    %v595 = vmul.f32 %v558, %v402
    %v596 = vmul.f32 %v562, %v403
    %v597 = vmul.f32 %v564, %v404
    %v598 = vmul.f32 %v568, %v405
    %v599 = vmul.f32 %v570, %v406
    %v600 = vmul.f32 %v574, %v407
    %v601 = vmul.f32 %v576, %v408
    %v602 = vmul.f32 %v580, %v409
    %v603 = vmul.f32 %v582, %v410
    %v604 = vmul.f32 %v586, %v411
    %v605 = vmul.f32 %v588, %v412
    %v606 = vadd.f32 %v590, %v591
    %607 = vadd.xlane.f32.xlu0 %v606
    %v608 = vpop.xlane.xlu0 %607
    %v609 = vadd.f32 %v592, %v593
    %610 = vadd.xlane.f32.xlu0 %v609
    %v611 = vpop.xlane.xlu0 %610
    %v612 = vadd.f32 %v594, %v595
    %613 = vadd.xlane.f32.xlu0 %v612
    %v614 = vpop.xlane.xlu0 %613
    %v615 = vadd.f32 %v596, %v597
    %616 = vadd.xlane.f32.xlu0 %v615
    %v617 = vpop.xlane.xlu0 %616
    %v618 = vadd.f32 %v598, %v599
    %619 = vadd.xlane.f32.xlu0 %v618
    %v620 = vpop.xlane.xlu0 %619
    %v621 = vadd.f32 %v600, %v601
    %622 = vadd.xlane.f32.xlu0 %v621
    %v623 = vpop.xlane.xlu0 %622
    %v624 = vadd.f32 %v602, %v603
    %625 = vadd.xlane.f32.xlu0 %v624
    %v626 = vpop.xlane.xlu0 %625
    %v627 = vadd.f32 %v604, %v605
    %628 = vadd.xlane.f32.xlu0 %v627
    %v629 = vpop.xlane.xlu0 %628
    %v630 = vmul.f32 %v375, %v375
    %v631 = vmul.f32 %v377, %v377
    %v632 = vadd.f32 %v630, %v631
    %633 = vadd.xlane.f32.xlu0 %v632
    %v634 = vpop.xlane.xlu0 %633
    %v635 = vld [vmem:[%s7] sm:$0xff]
    %644 = vrot.lane.b32.xlu0 %v437, 126
    %v645 = vpop.permute.xlu0 %644
    %646 = vrot.lane.b32.xlu0 %v438, 126
    %v647 = vpop.permute.xlu0 %646
    %648 = vrot.lane.b32.xlu0 %v439, 126
    %v649 = vpop.permute.xlu0 %648
    %650 = vrot.lane.b32.xlu0 %v440, 126
    %v651 = vpop.permute.xlu0 %650
    %652 = vrot.lane.b32.xlu0 %v441, 126
    %v653 = vpop.permute.xlu0 %652
    %654 = vrot.lane.b32.xlu0 %v442, 126
    %v655 = vpop.permute.xlu0 %654
    %656 = vrot.lane.b32.xlu0 %v443, 126
    %v657 = vpop.permute.xlu0 %656
    %658 = vrot.lane.b32.xlu0 %v444, 126
    %v659 = vpop.permute.xlu0 %658
    %v669 = vsel %vm304, %v635, 0
    %671 = vmatprep.subr.mxu0 0.0
    %672 = vmatpush1.msra.mxu0 %v645
    %673 = vmatprep.subr.mxu0 0.0
    %674 = vmatpush1.msra.mxu0 %v647
    %675 = vmatprep.subr.mxu0 0.0
    %676 = vmatpush1.msra.mxu0 %v649
    %677 = vmatprep.subr.mxu0 0.0
    %678 = vmatpush1.msra.mxu0 %v651
    %679 = vmatprep.subr.mxu0 0.0
    %680 = vmatpush1.msra.mxu0 %v653
    %681 = vmatprep.subr.mxu0 0.0
    %682 = vmatpush1.msra.mxu0 %v655
    %683 = vmatprep.subr.mxu0 0.0
    %684 = vmatpush1.msra.mxu0 %v657
    %685 = vmatprep.subr.mxu0 0.0
    %686 = vmatpush1.msra.mxu0 %v659
    %687 = vmatprep.subr.mxu0 0.0
    %688 = vmatpush1.msra.mxu0 0.0
    %689 = vmatprep.subr.mxu0 0.0
    %690 = vmatpush1.msra.mxu0 0.0
    %691 = vmatprep.subr.mxu0 0.0
    %692 = vmatpush1.msra.mxu0 0.0
    %693 = vmatprep.subr.mxu0 0.0
    %694 = vmatpush1.msra.mxu0 0.0
    %695 = vmatprep.subr.mxu0 0.0
    %696 = vmatpush1.msra.mxu0 0.0
    %697 = vmatprep.subr.mxu0 0.0
    %698 = vmatpush1.msra.mxu0 0.0
    %699 = vmatprep.subr.mxu0 0.0
    %700 = vmatpush1.msra.mxu0 0.0
    %701 = vmatprep.subr.mxu0 0.0
    %702 = vmatpush1.msra.mxu0 0.0
    %703 = vmatprep.subr.mxu0 0.0
    %704 = vmatpush1.msra.mxu0 0.0
    %705 = vmatprep.subr.mxu0 0.0
    %706 = vmatpush1.msra.mxu0 0.0
    %707 = vmatprep.subr.mxu0 0.0
    %708 = vmatpush1.msra.mxu0 0.0
    %709 = vmatprep.subr.mxu0 0.0
    %710 = vmatpush1.msra.mxu0 0.0
    %711 = vmatprep.subr.mxu0 0.0
    %712 = vmatpush1.msra.mxu0 0.0
    %713 = vmatprep.subr.mxu0 0.0
    %714 = vmatpush1.msra.mxu0 0.0
    %715 = vmatprep.subr.mxu0 0.0
    %716 = vmatpush1.msra.mxu0 0.0
    %717 = vmatprep.subr.mxu0 0.0
    %718 = vmatpush1.msra.mxu0 0.0
    %719 = vmatprep.subr.mxu0 0.0
    %720 = vmatpush1.msra.mxu0 0.0
    %721 = vmatprep.subr.mxu0 0.0
    %722 = vmatpush1.msra.mxu0 0.0
    %723 = vmatprep.subr.mxu0 0.0
    %724 = vmatpush1.msra.mxu0 0.0
    %725 = vmatprep.subr.mxu0 0.0
    %726 = vmatpush1.msra.mxu0 0.0
    %727 = vmatprep.subr.mxu0 0.0
    %728 = vmatpush1.msra.mxu0 0.0
    %729 = vmatprep.subr.mxu0 0.0
    %730 = vmatpush1.msra.mxu0 0.0
    %731 = vmatprep.subr.mxu0 0.0
    %732 = vmatpush1.msra.mxu0 0.0
    %733 = vmatprep.subr.mxu0 0.0
    %734 = vmatpush1.msra.mxu0 0.0
    %735 = vmatprep.mubr.f32.mxu0 0.0
    %736 = vmatmul.mubr.f32.gmra.mrb[0].mxu0 %v669
    %v737 = vpop.f32.mrb[0].mxu0
    %v738 = vadd.f32 0.0, %v737
    %v739 = vpop.f32.mrb[0].mxu0
    %740 = vdwg.mxu0
    %741 = vmatprep.subr.mxu0 0.0
    %742 = vmatpush1.msra.mxu0 %v608
    %743 = vmatprep.subr.mxu0 0.0
    %744 = vmatpush1.msra.mxu0 %v611
    %745 = vmatprep.subr.mxu0 0.0
    %746 = vmatpush1.msra.mxu0 %v614
    %747 = vmatprep.subr.mxu0 0.0
    %748 = vmatpush1.msra.mxu0 %v617
    %749 = vmatprep.subr.mxu0 0.0
    %750 = vmatpush1.msra.mxu0 %v620
    %751 = vmatprep.subr.mxu0 0.0
    %752 = vmatpush1.msra.mxu0 %v623
    %753 = vmatprep.subr.mxu0 0.0
    %754 = vmatpush1.msra.mxu0 %v626
    %755 = vmatprep.subr.mxu0 0.0
    %756 = vmatpush1.msra.mxu0 %v629
    %757 = vmatprep.subr.mxu0 0.0
    %758 = vmatpush1.msra.mxu0 0.0
    %759 = vmatprep.subr.mxu0 0.0
    %760 = vmatpush1.msra.mxu0 0.0
    %761 = vmatprep.subr.mxu0 0.0
    %762 = vmatpush1.msra.mxu0 0.0
    %763 = vmatprep.subr.mxu0 0.0
    %764 = vmatpush1.msra.mxu0 0.0
    %765 = vmatprep.subr.mxu0 0.0
    %766 = vmatpush1.msra.mxu0 0.0
    %767 = vmatprep.subr.mxu0 0.0
    %768 = vmatpush1.msra.mxu0 0.0
    %769 = vmatprep.subr.mxu0 0.0
    %770 = vmatpush1.msra.mxu0 0.0
    %771 = vmatprep.subr.mxu0 0.0
    %772 = vmatpush1.msra.mxu0 0.0
    %773 = vmatprep.subr.mxu0 0.0
    %774 = vmatpush1.msra.mxu0 0.0
    %775 = vmatprep.subr.mxu0 0.0
    %776 = vmatpush1.msra.mxu0 0.0
    %777 = vmatprep.subr.mxu0 0.0
    %778 = vmatpush1.msra.mxu0 0.0
    %779 = vmatprep.subr.mxu0 0.0
    %780 = vmatpush1.msra.mxu0 0.0
    %781 = vmatprep.subr.mxu0 0.0
    %782 = vmatpush1.msra.mxu0 0.0
    %783 = vmatprep.subr.mxu0 0.0
    %784 = vmatpush1.msra.mxu0 0.0
    %785 = vmatprep.subr.mxu0 0.0
    %786 = vmatpush1.msra.mxu0 0.0
    %787 = vmatprep.subr.mxu0 0.0
    %788 = vmatpush1.msra.mxu0 0.0
    %789 = vmatprep.subr.mxu0 0.0
    %790 = vmatpush1.msra.mxu0 0.0
    %791 = vmatprep.subr.mxu0 0.0
    %792 = vmatpush1.msra.mxu0 0.0
    %793 = vmatprep.subr.mxu0 0.0
    %794 = vmatpush1.msra.mxu0 0.0
    %795 = vmatprep.subr.mxu0 0.0
    %796 = vmatpush1.msra.mxu0 0.0
    %797 = vmatprep.subr.mxu0 0.0
    %798 = vmatpush1.msra.mxu0 0.0
    %799 = vmatprep.subr.mxu0 0.0
    %800 = vmatpush1.msra.mxu0 0.0
    %801 = vmatprep.subr.mxu0 0.0
    %802 = vmatpush1.msra.mxu0 0.0
    %803 = vmatprep.subr.mxu0 0.0
    %804 = vmatpush1.msra.mxu0 0.0
    %805 = vmatprep.mubr.f32.mxu0 0.0
    %806 = vmatmul.mubr.f32.gmra.mrb[0].mxu0 %v669
    %v807 = vpop.f32.mrb[0].mxu0
    %v808 = vadd.f32 0.0, %v807
    %v809 = vpop.f32.mrb[0].mxu0
    %810 = vdwg.mxu0
    %v811 = vld [vmem:[%s8] sm:$0xff]
    %v813 = vsel %vm143, %v811, 0
    %815 = vmatprep.subr.mxu0 0.0
    %816 = vmatpush1.msra.mxu0 %v634
    %817 = vmatprep.subr.mxu0 0.0
    %818 = vmatpush1.msra.mxu0 0.0
    %819 = vmatprep.subr.mxu0 0.0
    %820 = vmatpush1.msra.mxu0 0.0
    %821 = vmatprep.subr.mxu0 0.0
    %822 = vmatpush1.msra.mxu0 0.0
    %823 = vmatprep.subr.mxu0 0.0
    %824 = vmatpush1.msra.mxu0 0.0
    %825 = vmatprep.subr.mxu0 0.0
    %826 = vmatpush1.msra.mxu0 0.0
    %827 = vmatprep.subr.mxu0 0.0
    %828 = vmatpush1.msra.mxu0 0.0
    %829 = vmatprep.subr.mxu0 0.0
    %830 = vmatpush1.msra.mxu0 0.0
    %831 = vmatprep.subr.mxu0 0.0
    %832 = vmatpush1.msra.mxu0 0.0
    %833 = vmatprep.subr.mxu0 0.0
    %834 = vmatpush1.msra.mxu0 0.0
    %835 = vmatprep.subr.mxu0 0.0
    %836 = vmatpush1.msra.mxu0 0.0
    %837 = vmatprep.subr.mxu0 0.0
    %838 = vmatpush1.msra.mxu0 0.0
    %839 = vmatprep.subr.mxu0 0.0
    %840 = vmatpush1.msra.mxu0 0.0
    %841 = vmatprep.subr.mxu0 0.0
    %842 = vmatpush1.msra.mxu0 0.0
    %843 = vmatprep.subr.mxu0 0.0
    %844 = vmatpush1.msra.mxu0 0.0
    %845 = vmatprep.subr.mxu0 0.0
    %846 = vmatpush1.msra.mxu0 0.0
    %847 = vmatprep.subr.mxu0 0.0
    %848 = vmatpush1.msra.mxu0 0.0
    %849 = vmatprep.subr.mxu0 0.0
    %850 = vmatpush1.msra.mxu0 0.0
    %851 = vmatprep.subr.mxu0 0.0
    %852 = vmatpush1.msra.mxu0 0.0
    %853 = vmatprep.subr.mxu0 0.0
    %854 = vmatpush1.msra.mxu0 0.0
    %855 = vmatprep.subr.mxu0 0.0
    %856 = vmatpush1.msra.mxu0 0.0
    %857 = vmatprep.subr.mxu0 0.0
    %858 = vmatpush1.msra.mxu0 0.0
    %859 = vmatprep.subr.mxu0 0.0
    %860 = vmatpush1.msra.mxu0 0.0
    %861 = vmatprep.subr.mxu0 0.0
    %862 = vmatpush1.msra.mxu0 0.0
    %863 = vmatprep.subr.mxu0 0.0
    %864 = vmatpush1.msra.mxu0 0.0
    %865 = vmatprep.subr.mxu0 0.0
    %866 = vmatpush1.msra.mxu0 0.0
    %867 = vmatprep.subr.mxu0 0.0
    %868 = vmatpush1.msra.mxu0 0.0
    %869 = vmatprep.subr.mxu0 0.0
    %870 = vmatpush1.msra.mxu0 0.0
    %871 = vmatprep.subr.mxu0 0.0
    %872 = vmatpush1.msra.mxu0 0.0
    %873 = vmatprep.subr.mxu0 0.0
    %874 = vmatpush1.msra.mxu0 0.0
    %875 = vmatprep.subr.mxu0 0.0
    %876 = vmatpush1.msra.mxu0 0.0
    %877 = vmatprep.subr.mxu0 0.0
    %878 = vmatpush1.msra.mxu0 0.0
    %879 = vmatprep.mubr.f32.mxu0 0.0
    %880 = vmatmul.mubr.f32.gmra.mrb[0].mxu0 %v813
    %v881 = vpop.f32.mrb[0].mxu0
    %v882 = vadd.f32 0.0, %v881
    %v883 = vpop.f32.mrb[0].mxu0
    %884 = vdwg.mxu0
    %v885 = vlaneseq
    %v886 = vand.u32 %v885, 127
    %vm887 = vcmp.eq.s32.totalorder %v886, 0
    %889 = vset.pattern.permute.xlu0 0
    %890 = vperm.xlu0 %889, %v738
    %v891 = vpop.permute.xlu0 %890
    %v893 = vsel %vm887, %v891, 0.0
    %vm894 = vcmp.eq.s32.totalorder %v886, 1
    %896 = vset.pattern.permute.xlu0 0
    %897 = vperm.xlu0 %896, %v882
    %v898 = vpop.permute.xlu0 %897
    %v900 = vsel %vm894, %v898, 0.0
    %v901 = vadd.f32 %v893, %v900
    %vm902 = vcmp.eq.s32.totalorder %v886, 2
    %904 = vset.pattern.permute.xlu0 0
    %905 = vperm.xlu0 %904, %v808
    %v906 = vpop.permute.xlu0 %905
    %v908 = vsel %vm902, %v906, 0.0
    %v909 = vadd.f32 %v901, %v908
    %910 = vst [vmem:[#allocation6] sm:$0xff] %v909
    // Predicated region
    $region34: #{tpu_custom_call.1} parent=1 // pred_check
      _
    $region35: #{tpu_custom_call.1} parent=1 // pred_check_branch
      %912 = sbr.rel (0) target = $region37
    $region36: #{tpu_custom_call.1} parent=1 // pred_region
      %s914 = ssub.s32 256, 256
      %915 = vsyncadd [#allocation5], %s914
      %s917 = sshll.u32 [#allocation4], 4
      %s918 = int_to_ptr.vmem [resolvable:$true] %s917
      %920 = dma.vmem_to_hbm [thread:$0]  %s918, 256, %s9, [#allocation5]
    $region37: #{tpu_custom_call.1} parent=1 // pred_fallthru
      _
    // Predicated region
    $region38: #{tpu_custom_call.1} parent=1 // pred_check
      _
    $region39: #{tpu_custom_call.1} parent=1 // pred_check_branch
      %922 = sbr.rel (0) target = $region41
    $region40: #{tpu_custom_call.1} parent=1 // pred_region
      %s924 = ssub.s32 128, 128
      %925 = vsyncadd [#allocation7], %s924
      %s927 = sshll.u32 [#allocation6], 4
      %s928 = int_to_ptr.vmem [resolvable:$true] %s927
      %930 = dma.vmem_to_hbm [thread:$0]  %s928, 128, %s10, [#allocation7]
    $region41: #{tpu_custom_call.1} parent=1 // pred_fallthru
      _
    // Predicated region
    $region42: #{tpu_custom_call.1} parent=1 // pred_check
      _
    $region43: #{tpu_custom_call.1} parent=1 // pred_check_branch
      %932 = sbr.rel (0) target = $region45
    $region44: #{tpu_custom_call.1} parent=1 // pred_region
      %933 = dma.done [#allocation5], 256
    $region45: #{tpu_custom_call.1} parent=1 // pred_fallthru
      _
    // Predicated region
    $region46: #{tpu_custom_call.1} parent=1 // pred_check
      _
    $region47: #{tpu_custom_call.1} parent=1 // pred_check_branch
      %935 = sbr.rel (0) target = $region49
    $region48: #{tpu_custom_call.1} parent=1 // pred_region
      %936 = dma.done [#allocation7], 128
    $region49: #{tpu_custom_call.1} parent=1 // pred_fallthru
      _
    %937 = vsyncpa [#allocation5], 1
    %938 = vsyncpa [#allocation7], 1

</llo_original>
